<compile_context>
chip_gen: v6e
topology: v6e:2x2x1
jax: 0.10.0
libtpu: 0.0.40
codegen_flags: <defaults>
</compile_context>

<pallas_src>
import math

import jax
import jax.numpy as jnp
from jax import lax
from jax.experimental import pallas as pl
from jax.experimental.pallas import tpu as pltpu

_INV_SQRT2 = 1.0 / math.sqrt(2.0)


def _round_up(n: int, m: int) -> int:
    return ((n + m - 1) // m) * m


def _make_ffn_kernel(d_in: int, eps: float, compute_dtype):
    inv_d = 1.0 / float(d_in)

    def kernel(x_ref, w1_ref, b1_ref, w2_ref, b2_ref, g_ref, beta_ref, o_ref):
        # Hoist parameter reads / broadcasts: read once per tile, keep in f32.
        b1 = b1_ref[...].astype(jnp.float32)       # (1, d_hid_p)
        b2 = b2_ref[...].astype(jnp.float32)       # (1, d_in_p)
        g = g_ref[...].astype(jnp.float32)         # (1, d_in_p)
        beta = beta_ref[...].astype(jnp.float32)   # (1, d_in_p)

        x_raw = x_ref[...]                         # (tm, d_in_p), input dtype
        x_res = x_raw.astype(jnp.float32)          # exact residual in f32
        x_mx = x_raw.astype(compute_dtype)         # MXU operand (bf16 on v6e/v7x)

        # ---- W1 + bias + exact GELU (erf form; matches F.gelu default) ----
        h = jnp.dot(x_mx, w1_ref[...], preferred_element_type=jnp.float32) + b1
        h = 0.5 * h * (1.0 + lax.erf(h * _INV_SQRT2))

        # ---- W2 + bias (hidden activation fed to MXU in compute dtype) ----
        y = jnp.dot(h.astype(compute_dtype), w2_ref[...],
                    preferred_element_type=jnp.float32) + b2

        # TODO(synk): nn.Dropout(p=0.1) is identity at inference; training-mode
        # dropout (pltpu.prng_random_bits mask) intentionally not applied here.

        # ---- residual add + LayerNorm over the REAL d_in lanes ----
        # Padded lanes of y and x are zero by construction, so sums over the
        # padded width divided by the true d_in give exact statistics
        # (biased variance via E[y^2] - mean^2, eps = 1e-5, as in PyTorch).
        y = y + x_res
        mean = jnp.sum(y, axis=-1, keepdims=True) * inv_d
        var = jnp.sum(y * y, axis=-1, keepdims=True) * inv_d - mean * mean
        y_norm = (y - mean) * lax.rsqrt(var + eps)
        o_ref[...] = (y_norm * g + beta).astype(o_ref.dtype)

    return kernel


def positionwise_ffn(x, w1, b1, w2, b2, gamma, beta, *,
                     tm: int = 256, compute_dtype=None, eps: float = 1e-5,
                     vmem_limit_bytes: int = 64 * 1024 * 1024):
    """Positionwise FFN + residual + LayerNorm.

    x: (B, S, d_in); w1: (d_hid, d_in); b1: (d_hid,); w2: (d_in, d_hid);
    b2: (d_in,); gamma/beta: (d_in,)  -- PyTorch nn.Linear / nn.LayerNorm shapes.
    compute_dtype: dtype fed to the MXU (bf16 recommended on v6e/v7x);
    accumulation and the residual+LayerNorm epilogue are always f32.
    """
    B, S, d_in = x.shape
    d_hid = w1.shape[0]
    if compute_dtype is None:
        compute_dtype = x.dtype
    compute_dtype = jnp.dtype(compute_dtype)

    rows = B * S
    # Row tile: multiple of the sublane count; clamp so tiny inputs do not pay
    # for a mostly-padding tile.  Rows are padded (not asserted) to a multiple.
    tm = _round_up(max(tm, 8), 8)
    tm = min(tm, _round_up(rows, 8))
    rows_p = _round_up(rows, tm)

    # Lane-dense feature dims (multiples of 128) -> unmasked vector stores and
    # fully used vregs in the GELU / LayerNorm epilogue.
    d_in_p = _round_up(d_in, 128)
    d_hid_p = _round_up(d_hid, 128)

    x2 = jnp.pad(x.reshape(rows, d_in),
                 ((0, rows_p - rows), (0, d_in_p - d_in)))

    # Weights pre-transposed so the kernel does plain row-major matmuls; kept
    # in compute_dtype (halves VMEM footprint / HBM traffic when bf16).
    w1_t = jnp.pad(w1.T.astype(compute_dtype),
                   ((0, d_in_p - d_in), (0, d_hid_p - d_hid)))
    w2_t = jnp.pad(w2.T.astype(compute_dtype),
                   ((0, d_hid_p - d_hid), (0, d_in_p - d_in)))
    b1_r = jnp.pad(b1.astype(jnp.float32), (0, d_hid_p - d_hid)).reshape(1, d_hid_p)
    b2_r = jnp.pad(b2.astype(jnp.float32), (0, d_in_p - d_in)).reshape(1, d_in_p)
    g_r = jnp.pad(gamma.astype(jnp.float32), (0, d_in_p - d_in)).reshape(1, d_in_p)
    be_r = jnp.pad(beta.astype(jnp.float32), (0, d_in_p - d_in)).reshape(1, d_in_p)

    grid = (rows_p // tm,)

    # Advisory cost so XLA can schedule surrounding ops around the custom call.
    w_itemsize = compute_dtype.itemsize
    x_itemsize = jnp.dtype(x.dtype).itemsize
    cost = pl.CostEstimate(
        flops=4 * rows_p * d_in_p * d_hid_p,              # two matmuls, 2 flop/MAC
        transcendentals=rows_p * d_hid_p,                 # erf in the GELU
        bytes_accessed=(2 * rows_p * d_in_p * x_itemsize  # x in + out
                        + 2 * d_in_p * d_hid_p * w_itemsize
                        + (d_hid_p + 3 * d_in_p) * 4))

    out = pl.pallas_call(
        _make_ffn_kernel(d_in, eps, compute_dtype),
        out_shape=jax.ShapeDtypeStruct((rows_p, d_in_p), x.dtype),
        grid_spec=pltpu.PrefetchScalarGridSpec(
            num_scalar_prefetch=0,
            grid=grid,
            in_specs=[
                pl.BlockSpec((tm, d_in_p), lambda i: (i, 0)),       # x tile
                # Constant index_maps: weights/params stay resident in VMEM,
                # no per-step re-DMA.
                pl.BlockSpec((d_in_p, d_hid_p), lambda i: (0, 0)),  # W1^T
                pl.BlockSpec((1, d_hid_p), lambda i: (0, 0)),       # b1
                pl.BlockSpec((d_hid_p, d_in_p), lambda i: (0, 0)),  # W2^T
                pl.BlockSpec((1, d_in_p), lambda i: (0, 0)),        # b2
                pl.BlockSpec((1, d_in_p), lambda i: (0, 0)),        # gamma
                pl.BlockSpec((1, d_in_p), lambda i: (0, 0)),        # beta
            ],
            out_specs=pl.BlockSpec((tm, d_in_p), lambda i: (i, 0)),
        ),
        compiler_params=pltpu.CompilerParams(
            dimension_semantics=("parallel",),   # row axis shards across TCs
            # Explicit budget: fits v7x's 64 MiB physical VMEM; raise toward
            # 128 MiB on v5e/v6e if d_hid is very large.
            vmem_limit_bytes=vmem_limit_bytes,
        ),
        cost_estimate=cost,
    )(x2, w1_t, b1_r, w2_t, b2_r, g_r, be_r)

    return out[:rows, :d_in].reshape(B, S, d_in)


def _reference(x, w1, b1, w2, b2, gamma, beta):
    h = jnp.einsum("bsd,hd->bsh", x, w1) + b1
    h = 0.5 * h * (1.0 + lax.erf(h / jnp.sqrt(2.0)))
    y = jnp.einsum("bsh,dh->bsd", h, w2) + b2
    y = y + x
    mean = jnp.mean(y, axis=-1, keepdims=True)
    var = jnp.mean(jnp.square(y - mean), axis=-1, keepdims=True)
    return (y - mean) * lax.rsqrt(var + 1e-5) * gamma + beta


if __name__ == "__main__":
    B, S, d_in, d_hid = 2, 8, 32, 64  # small demo shapes (B*S = 16 rows)
    key = jax.random.PRNGKey(0)
    kx, k1, kb1, k2, kb2 = jax.random.split(key, 5)

    x = jax.random.normal(kx, (B, S, d_in), jnp.float32)
    # Deterministic synthetic parameters (PyTorch-shaped: Linear weight is (out, in)).
    w1 = jax.random.normal(k1, (d_hid, d_in), jnp.float32) * (1.0 / math.sqrt(d_in))
    b1 = jax.random.normal(kb1, (d_hid,), jnp.float32) * 0.02
    w2 = jax.random.normal(k2, (d_in, d_hid), jnp.float32) * (1.0 / math.sqrt(d_hid))
    b2 = jax.random.normal(kb2, (d_in,), jnp.float32) * 0.02
    gamma = jnp.ones((d_in,), jnp.float32)
    beta = jnp.zeros((d_in,), jnp.float32)

    ref = _reference(x, w1, b1, w2, b2, gamma, beta)

    # Exact-semantics path: f32 MXU operands, tight tolerance vs f32 reference.
    out_f32 = positionwise_ffn(x, w1, b1, w2, b2, gamma, beta,
                               compute_dtype=jnp.float32)
    jax.block_until_ready(out_f32)
    assert out_f32.shape == (B, S, d_in)
    assert jnp.allclose(out_f32, ref, atol=1e-4, rtol=1e-4), "f32 mismatch vs reference"

    # Fast path (recommended on v6e/v7x): bf16 MXU operands, f32 accumulation
    # and f32 residual+LayerNorm epilogue; looser tolerance vs f32 reference.
    out_bf16 = positionwise_ffn(x, w1, b1, w2, b2, gamma, beta,
                                compute_dtype=jnp.bfloat16)
    jax.block_until_ready(out_bf16)
    assert out_bf16.shape == (B, S, d_in)
    assert jnp.allclose(out_bf16, ref, atol=8e-2, rtol=8e-2), "bf16 mismatch vs reference"

    print("KERNEL_OK")
</pallas_src>

<mosaic_0001>
module attributes {stable_mosaic.version = 11 : i64} {
  func.func @kernel(%arg0: i32, %arg1: memref<16x128xf32, #tpu.memory_space<vmem>>, %arg2: memref<128x128xf32, #tpu.memory_space<vmem>>, %arg3: memref<1x128xf32, #tpu.memory_space<vmem>>, %arg4: memref<128x128xf32, #tpu.memory_space<vmem>>, %arg5: memref<1x128xf32, #tpu.memory_space<vmem>>, %arg6: memref<1x128xf32, #tpu.memory_space<vmem>>, %arg7: memref<1x128xf32, #tpu.memory_space<vmem>>, %arg8: memref<16x128xf32, #tpu.memory_space<vmem>>) attributes {dimension_semantics = [#tpu.dimension_semantics<parallel>], iteration_bounds = array<i64: 1>, scalar_prefetch = 0 : i64, scratch_operands = 0 : i64, tpu.core_type = #tpu.core_type<tc>, window_params = [{transform_indices = @transform_0, window_bounds = array<i64: 16, 128>}, {pipeline_mode = #tpu.pipeline_mode<synchronous>, transform_indices = @transform_1, window_bounds = array<i64: 128, 128>}, {pipeline_mode = #tpu.pipeline_mode<synchronous>, transform_indices = @transform_2, window_bounds = array<i64: 1, 128>}, {pipeline_mode = #tpu.pipeline_mode<synchronous>, transform_indices = @transform_3, window_bounds = array<i64: 128, 128>}, {pipeline_mode = #tpu.pipeline_mode<synchronous>, transform_indices = @transform_4, window_bounds = array<i64: 1, 128>}, {pipeline_mode = #tpu.pipeline_mode<synchronous>, transform_indices = @transform_5, window_bounds = array<i64: 1, 128>}, {pipeline_mode = #tpu.pipeline_mode<synchronous>, transform_indices = @transform_6, window_bounds = array<i64: 1, 128>}, {transform_indices = @transform_7, window_bounds = array<i64: 16, 128>}]} {
    %c0 = arith.constant 0 : index
    %c0_0 = arith.constant 0 : index
    %0 = vector.load %arg3[%c0, %c0_0] : memref<1x128xf32, #tpu.memory_space<vmem>>, vector<1x128xf32>
    %c0_1 = arith.constant 0 : index
    %c0_2 = arith.constant 0 : index
    %1 = vector.load %arg5[%c0_1, %c0_2] : memref<1x128xf32, #tpu.memory_space<vmem>>, vector<1x128xf32>
    %c0_3 = arith.constant 0 : index
    %c0_4 = arith.constant 0 : index
    %2 = vector.load %arg6[%c0_3, %c0_4] : memref<1x128xf32, #tpu.memory_space<vmem>>, vector<1x128xf32>
    %c0_5 = arith.constant 0 : index
    %c0_6 = arith.constant 0 : index
    %3 = vector.load %arg7[%c0_5, %c0_6] : memref<1x128xf32, #tpu.memory_space<vmem>>, vector<1x128xf32>
    %c0_7 = arith.constant 0 : index
    %c0_8 = arith.constant 0 : index
    %4 = vector.load %arg1[%c0_7, %c0_8] : memref<16x128xf32, #tpu.memory_space<vmem>>, vector<16x128xf32>
    %c0_9 = arith.constant 0 : index
    %c0_10 = arith.constant 0 : index
    %5 = vector.load %arg2[%c0_9, %c0_10] : memref<128x128xf32, #tpu.memory_space<vmem>>, vector<128x128xf32>
    %cst = arith.constant dense<0.000000e+00> : vector<16x128xf32>
    %6 = tpu.matmul %4, %5, %cst {dimension_numbers = #tpu.dot_dimension_numbers<[1], [0], [0], [1], [0, 0, 1, 1], [], []>} : vector<16x128xf32>, vector<128x128xf32>, vector<16x128xf32> -> vector<16x128xf32>
    %7 = vector.broadcast %0 : vector<1x128xf32> to vector<16x128xf32>
    %8 = arith.addf %6, %7 : vector<16x128xf32>
    %cst_11 = arith.constant 5.000000e-01 : f32
    %9 = vector.broadcast %cst_11 : f32 to vector<16x128xf32>
    %10 = arith.mulf %9, %8 : vector<16x128xf32>
    %cst_12 = arith.constant 0.707106769 : f32
    %11 = vector.broadcast %cst_12 : f32 to vector<16x128xf32>
    %12 = arith.mulf %8, %11 : vector<16x128xf32>
    %13 = math.erf %12 : vector<16x128xf32>
    %cst_13 = arith.constant 1.000000e+00 : f32
    %14 = vector.broadcast %cst_13 : f32 to vector<16x128xf32>
    %15 = arith.addf %14, %13 : vector<16x128xf32>
    %16 = arith.mulf %10, %15 : vector<16x128xf32>
    %c0_14 = arith.constant 0 : index
    %c0_15 = arith.constant 0 : index
    %17 = vector.load %arg4[%c0_14, %c0_15] : memref<128x128xf32, #tpu.memory_space<vmem>>, vector<128x128xf32>
    %cst_16 = arith.constant dense<0.000000e+00> : vector<16x128xf32>
    %18 = tpu.matmul %16, %17, %cst_16 {dimension_numbers = #tpu.dot_dimension_numbers<[1], [0], [0], [1], [0, 0, 1, 1], [], []>} : vector<16x128xf32>, vector<128x128xf32>, vector<16x128xf32> -> vector<16x128xf32>
    %19 = vector.broadcast %1 : vector<1x128xf32> to vector<16x128xf32>
    %20 = arith.addf %18, %19 : vector<16x128xf32>
    %21 = arith.addf %20, %4 : vector<16x128xf32>
    %cst_17 = arith.constant dense<0.000000e+00> : vector<16xf32>
    %22 = vector.multi_reduction <add>, %21, %cst_17 [1] : vector<16x128xf32> to vector<16xf32>
    %23 = vector.shape_cast %22 : vector<16xf32> to vector<16x1xf32>
    %cst_18 = arith.constant 3.125000e-02 : f32
    %24 = vector.broadcast %cst_18 : f32 to vector<16x1xf32>
    %25 = arith.mulf %23, %24 : vector<16x1xf32>
    %26 = arith.mulf %21, %21 : vector<16x128xf32>
    %cst_19 = arith.constant dense<0.000000e+00> : vector<16xf32>
    %27 = vector.multi_reduction <add>, %26, %cst_19 [1] : vector<16x128xf32> to vector<16xf32>
    %28 = vector.shape_cast %27 : vector<16xf32> to vector<16x1xf32>
    %cst_20 = arith.constant 3.125000e-02 : f32
    %29 = vector.broadcast %cst_20 : f32 to vector<16x1xf32>
    %30 = arith.mulf %28, %29 : vector<16x1xf32>
    %31 = arith.mulf %25, %25 : vector<16x1xf32>
    %32 = arith.subf %30, %31 : vector<16x1xf32>
    %33 = vector.broadcast %25 : vector<16x1xf32> to vector<16x128xf32>
    %34 = arith.subf %21, %33 : vector<16x128xf32>
    %cst_21 = arith.constant 9.99999974E-6 : f32
    %35 = vector.broadcast %cst_21 : f32 to vector<16x1xf32>
    %36 = arith.addf %32, %35 : vector<16x1xf32>
    %37 = math.rsqrt %36 : vector<16x1xf32>
    %38 = vector.broadcast %37 : vector<16x1xf32> to vector<16x128xf32>
    %39 = arith.mulf %34, %38 : vector<16x128xf32>
    %40 = vector.broadcast %2 : vector<1x128xf32> to vector<16x128xf32>
    %41 = arith.mulf %39, %40 : vector<16x128xf32>
    %42 = vector.broadcast %3 : vector<1x128xf32> to vector<16x128xf32>
    %43 = arith.addf %41, %42 : vector<16x128xf32>
    %c0_22 = arith.constant 0 : index
    %c0_23 = arith.constant 0 : index
    %44 = vector.load %arg8[%c0_22, %c0_23] : memref<16x128xf32, #tpu.memory_space<vmem>>, vector<16x128xf32>
    tpu.vector_store %arg8[%c0_22, %c0_23], %43 {strides = array<i32>} : memref<16x128xf32, #tpu.memory_space<vmem>>, vector<16x128xf32>,
    return
  }
  func.func @transform_0(%arg0: i32) -> (i32, i32) {
    %c0_i32 = arith.constant 0 : i32
    %c0_i32_0 = arith.constant 0 : i32
    return %arg0, %c0_i32 : i32, i32
  }
  func.func @transform_1(%arg0: i32) -> (i32, i32) {
    %c0_i32 = arith.constant 0 : i32
    %c0_i32_0 = arith.constant 0 : i32
    %c0_i32_1 = arith.constant 0 : i32
    return %c0_i32, %c0_i32_0 : i32, i32
  }
  func.func @transform_2(%arg0: i32) -> (i32, i32) {
    %c0_i32 = arith.constant 0 : i32
    %c0_i32_0 = arith.constant 0 : i32
    %c0_i32_1 = arith.constant 0 : i32
    return %c0_i32, %c0_i32_0 : i32, i32
  }
  func.func @transform_3(%arg0: i32) -> (i32, i32) {
    %c0_i32 = arith.constant 0 : i32
    %c0_i32_0 = arith.constant 0 : i32
    %c0_i32_1 = arith.constant 0 : i32
    return %c0_i32, %c0_i32_0 : i32, i32
  }
  func.func @transform_4(%arg0: i32) -> (i32, i32) {
    %c0_i32 = arith.constant 0 : i32
    %c0_i32_0 = arith.constant 0 : i32
    %c0_i32_1 = arith.constant 0 : i32
    return %c0_i32, %c0_i32_0 : i32, i32
  }
  func.func @transform_5(%arg0: i32) -> (i32, i32) {
    %c0_i32 = arith.constant 0 : i32
    %c0_i32_0 = arith.constant 0 : i32
    %c0_i32_1 = arith.constant 0 : i32
    return %c0_i32, %c0_i32_0 : i32, i32
  }
  func.func @transform_6(%arg0: i32) -> (i32, i32) {
    %c0_i32 = arith.constant 0 : i32
    %c0_i32_0 = arith.constant 0 : i32
    %c0_i32_1 = arith.constant 0 : i32
    return %c0_i32, %c0_i32_0 : i32, i32
  }
  func.func @transform_7(%arg0: i32) -> (i32, i32) {
    %c0_i32 = arith.constant 0 : i32
    %c0_i32_0 = arith.constant 0 : i32
    return %arg0, %c0_i32 : i32, i32
  }
}

</mosaic_0001>

<llo_original>
// kernel: tpu_custom_call.1
$region0: #{tpu_custom_call.1}
  #allocation0 [shape = 'u32[]', space=smem, size = 0x4, offset = 0x4, fixed_abs, tag = 'smem constant byte address 0x4 - core index']
  #allocation1 [shape = 'u32[144,128]{1,0:T(1,128)}', space=vmem, size = 0x12000, scoped, tag = 'internal scratch']
  %s0 = inlined_call_operand.hbm [shape: f32[16,128], index: 0, kind: input, shape index: {}]
  %s1 = inlined_call_operand.hbm [shape: f32[128,128], index: 1, kind: input, shape index: {}]
  %s2 = inlined_call_operand.vmem [shape: f32[1,128], index: 2, kind: input, shape index: {}]
  %s3 = inlined_call_operand.hbm [shape: f32[128,128], index: 3, kind: input, shape index: {}]
  %s4 = inlined_call_operand.vmem [shape: f32[1,128], index: 4, kind: input, shape index: {}]
  %s5 = inlined_call_operand.vmem [shape: f32[1,128], index: 5, kind: input, shape index: {}]
  %s6 = inlined_call_operand.vmem [shape: f32[1,128], index: 6, kind: input, shape index: {}]
  %s7 = inlined_call_operand.hbm [shape: f32[16,128], index: 7, kind: output, shape index: {}]
  %s8 = sld [smem:[#allocation0]]
  $region50: #{tpu_custom_call.1} parent=0
    _
  %s10 = ssub.s32 1, %s8
  %s11 = scalar_select 0, %s10, %s8
  $region1: #{tpu_custom_call.1} parent=0
    #allocation2 [shape = 'u8[8192]{0}', space=vmem, size = 0x2000, scoped, tag = 'input window, operand 0, single buffered']
    #allocation3 [shape = 's32[1]{0}', space=sflag, size = 0x4, scoped, tag = 'scoped memory for tpu_custom_call.1']
    #allocation4 [shape = 's32[1]{0}', space=sflag, size = 0x4, scoped, tag = 'scoped memory for tpu_custom_call.1']
    #allocation5 [shape = 'u8[65536]{0}', space=vmem, size = 0x10000, scoped, tag = 'input window, operand 1, single buffered']
    #allocation6 [shape = 's32[1]{0}', space=sflag, size = 0x4, scoped, tag = 'scoped memory for tpu_custom_call.1']
    #allocation7 [shape = 'u8[65536]{0}', space=vmem, size = 0x10000, scoped, tag = 'input window, operand 3, single buffered']
    #allocation8 [shape = 'u8[8192]{0}', space=vmem, size = 0x2000, scoped, tag = 'output window, operand 0, single buffered']
    %12 = vsyncpa [#allocation3], 0
    %13 = vsyncpa [#allocation6], 0
    %14 = vsyncpa [#allocation4], 0
    // Predicated region
    $region2: #{tpu_custom_call.1} parent=1 // pred_check
      _
    $region3: #{tpu_custom_call.1} parent=1 // pred_check_branch
      %16 = sbr.rel (0) target = $region5
    $region4: #{tpu_custom_call.1} parent=1 // pred_region
      %s18 = ssub.s32 256, 256
      %19 = vsyncadd [#allocation3], %s18
      %s20 = sshll.u32 [#allocation2], 4
      %s21 = int_to_ptr.vmem [resolvable:$true] %s20
      %26 = dma.hbm_to_vmem [thread:$0]  %s0, 256, %s21, [#allocation3], 128, 128, 8
    $region5: #{tpu_custom_call.1} parent=1 // pred_fallthru
      _
    // Predicated region
    $region6: #{tpu_custom_call.1} parent=1 // pred_check
      _
    $region7: #{tpu_custom_call.1} parent=1 // pred_check_branch
      %28 = sbr.rel (0) target = $region9
    $region8: #{tpu_custom_call.1} parent=1 // pred_region
      %s30 = ssub.s32 2048, 2048
      %31 = vsyncadd [#allocation6], %s30
      %s32 = sshll.u32 [#allocation5], 4
      %s33 = int_to_ptr.vmem [resolvable:$true] %s32
      %38 = dma.hbm_to_vmem [thread:$0]  %s1, 2048, %s33, [#allocation6], 128, 128, 8
    $region9: #{tpu_custom_call.1} parent=1 // pred_fallthru
      _
    // Predicated region
    $region10: #{tpu_custom_call.1} parent=1 // pred_check
      _
    $region11: #{tpu_custom_call.1} parent=1 // pred_check_branch
      %40 = sbr.rel (0) target = $region13
    $region12: #{tpu_custom_call.1} parent=1 // pred_region
      _
    $region13: #{tpu_custom_call.1} parent=1 // pred_fallthru
      _
    // Predicated region
    $region14: #{tpu_custom_call.1} parent=1 // pred_check
      _
    $region15: #{tpu_custom_call.1} parent=1 // pred_check_branch
      %42 = sbr.rel (0) target = $region17
    $region16: #{tpu_custom_call.1} parent=1 // pred_region
      %s44 = ssub.s32 2048, 2048
      %45 = vsyncadd [#allocation6], %s44
      %s46 = sshll.u32 [#allocation7], 4
      %s47 = int_to_ptr.vmem [resolvable:$true] %s46
      %52 = dma.hbm_to_vmem [thread:$0]  %s3, 2048, %s47, [#allocation6], 128, 128, 8
    $region17: #{tpu_custom_call.1} parent=1 // pred_fallthru
      _
    // Predicated region
    $region18: #{tpu_custom_call.1} parent=1 // pred_check
      _
    $region19: #{tpu_custom_call.1} parent=1 // pred_check_branch
      %54 = sbr.rel (0) target = $region21
    $region20: #{tpu_custom_call.1} parent=1 // pred_region
      _
    $region21: #{tpu_custom_call.1} parent=1 // pred_fallthru
      _
    // Predicated region
    $region22: #{tpu_custom_call.1} parent=1 // pred_check
      _
    $region23: #{tpu_custom_call.1} parent=1 // pred_check_branch
      %56 = sbr.rel (0) target = $region25
    $region24: #{tpu_custom_call.1} parent=1 // pred_region
      _
    $region25: #{tpu_custom_call.1} parent=1 // pred_fallthru
      _
    // Predicated region
    $region26: #{tpu_custom_call.1} parent=1 // pred_check
      _
    $region27: #{tpu_custom_call.1} parent=1 // pred_check_branch
      %58 = sbr.rel (0) target = $region29
    $region28: #{tpu_custom_call.1} parent=1 // pred_region
      _
    $region29: #{tpu_custom_call.1} parent=1 // pred_fallthru
      _
    // Predicated region
    $region30: #{tpu_custom_call.1} parent=1 // pred_check
      _
    $region31: #{tpu_custom_call.1} parent=1 // pred_check_branch
      %60 = sbr.rel (0) target = $region33
    $region32: #{tpu_custom_call.1} parent=1 // pred_region
      %61 = dma.done [#allocation3], 256
    $region33: #{tpu_custom_call.1} parent=1 // pred_fallthru
      _
    // Predicated region
    $region34: #{tpu_custom_call.1} parent=1 // pred_check
      _
    $region35: #{tpu_custom_call.1} parent=1 // pred_check_branch
      %63 = sbr.rel (0) target = $region37
    $region36: #{tpu_custom_call.1} parent=1 // pred_region
      %64 = dma.done [#allocation6], 2048
    $region37: #{tpu_custom_call.1} parent=1 // pred_fallthru
      _
    // Predicated region
    $region38: #{tpu_custom_call.1} parent=1 // pred_check
      _
    $region39: #{tpu_custom_call.1} parent=1 // pred_check_branch
      %66 = sbr.rel (0) target = $region41
    $region40: #{tpu_custom_call.1} parent=1 // pred_region
      %67 = dma.done [#allocation6], 2048
    $region41: #{tpu_custom_call.1} parent=1 // pred_fallthru
      _
    %v68 = vld [vmem:[%s2] sm:$0x1]
    %v69 = vld [vmem:[%s4] sm:$0x1]
    %v70 = vld [vmem:[%s5] sm:$0x1]
    %v71 = vld [vmem:[%s6] sm:$0x1]
    %v72 = vld [vmem:[#allocation2] sm:$0xff]
    %v73 = vld [vmem:[#allocation2 + $0x8] sm:$0xff]
    %v74 = vld [vmem:[#allocation5] sm:$0xff]
    %v75 = vld [vmem:[#allocation5 + $0x8] sm:$0xff]
    %v76 = vld [vmem:[#allocation5 + $0x10] sm:$0xff]
    %v77 = vld [vmem:[#allocation5 + $0x18] sm:$0xff]
    %v78 = vld [vmem:[#allocation5 + $0x20] sm:$0xff]
    %v79 = vld [vmem:[#allocation5 + $0x28] sm:$0xff]
    %v80 = vld [vmem:[#allocation5 + $0x30] sm:$0xff]
    %v81 = vld [vmem:[#allocation5 + $0x38] sm:$0xff]
    %v82 = vld [vmem:[#allocation5 + $0x40] sm:$0xff]
    %v83 = vld [vmem:[#allocation5 + $0x48] sm:$0xff]
    %v84 = vld [vmem:[#allocation5 + $0x50] sm:$0xff]
    %v85 = vld [vmem:[#allocation5 + $0x58] sm:$0xff]
    %v86 = vld [vmem:[#allocation5 + $0x60] sm:$0xff]
    %v87 = vld [vmem:[#allocation5 + $0x68] sm:$0xff]
    %v88 = vld [vmem:[#allocation5 + $0x70] sm:$0xff]
    %v89 = vld [vmem:[#allocation5 + $0x78] sm:$0xff]
    %v91 = vlaneseq
    %v92 = vshrl.u32 %v91, 7
    %v93 = vsub.s32 0, %v92
    %v94 = vrot.slane %v68, %v93
    %96 = vmatprep.subr.mxu0 0.0
    %97 = vmatpush1.msra.mxu0 %v89
    %98 = vmatprep.subr.mxu0 0.0
    %99 = vmatpush1.msra.mxu0 %v88
    %100 = vmatprep.subr.mxu0 0.0
    %101 = vmatpush1.msra.mxu0 %v87
    %102 = vmatprep.subr.mxu0 0.0
    %103 = vmatpush1.msra.mxu0 %v86
    %104 = vmatprep.subr.mxu0 0.0
    %105 = vmatpush1.msra.mxu0 %v85
    %106 = vmatprep.subr.mxu0 0.0
    %107 = vmatpush1.msra.mxu0 %v84
    %108 = vmatprep.subr.mxu0 0.0
    %109 = vmatpush1.msra.mxu0 %v83
    %110 = vmatprep.subr.mxu0 0.0
    %111 = vmatpush1.msra.mxu0 %v82
    %112 = vmatprep.subr.mxu0 0.0
    %113 = vmatpush1.msra.mxu0 %v81
    %114 = vmatprep.subr.mxu0 0.0
    %115 = vmatpush1.msra.mxu0 %v80
    %116 = vmatprep.subr.mxu0 0.0
    %117 = vmatpush1.msra.mxu0 %v79
    %118 = vmatprep.subr.mxu0 0.0
    %119 = vmatpush1.msra.mxu0 %v78
    %120 = vmatprep.subr.mxu0 0.0
    %121 = vmatpush1.msra.mxu0 %v77
    %122 = vmatprep.subr.mxu0 0.0
    %123 = vmatpush1.msra.mxu0 %v76
    %124 = vmatprep.subr.mxu0 0.0
    %125 = vmatpush1.msra.mxu0 %v75
    %126 = vmatprep.subr.mxu0 0.0
    %127 = vmatpush1.msra.mxu0 %v74
    %128 = vmatprep.subr.mxu0 0.0
    %129 = vmatpush2.msra.mxu0 0.0
    %130 = vmatprep.subr.mxu0 0.0
    %131 = vmatpush2.msra.mxu0 0.0
    %132 = vmatprep.subr.mxu0 0.0
    %133 = vmatpush2.msra.mxu0 0.0
    %134 = vmatprep.subr.mxu0 0.0
    %135 = vmatpush2.msra.mxu0 0.0
    %136 = vmatprep.subr.mxu0 0.0
    %137 = vmatpush2.msra.mxu0 0.0
    %138 = vmatprep.subr.mxu0 0.0
    %139 = vmatpush2.msra.mxu0 0.0
    %140 = vmatprep.subr.mxu0 0.0
    %141 = vmatpush2.msra.mxu0 0.0
    %142 = vmatprep.subr.mxu0 0.0
    %143 = vmatpush2.msra.mxu0 0.0
    %144 = vmatprep.subr.mxu0 0.0
    %145 = vmatpush2.msra.mxu0 0.0
    %146 = vmatprep.subr.mxu0 0.0
    %147 = vmatpush2.msra.mxu0 0.0
    %148 = vmatprep.subr.mxu0 0.0
    %149 = vmatpush2.msra.mxu0 0.0
    %150 = vmatprep.subr.mxu0 0.0
    %151 = vmatpush2.msra.mxu0 0.0
    %152 = vmatprep.subr.mxu0 0.0
    %153 = vmatpush2.msra.mxu0 0.0
    %154 = vmatprep.subr.mxu0 0.0
    %155 = vmatpush2.msra.mxu0 0.0
    %156 = vmatprep.subr.mxu0 0.0
    %157 = vmatpush2.msra.mxu0 0.0
    %158 = vmatprep.subr.mxu0 0.0
    %159 = vmatpush2.msra.mxu0 0.0
    %160 = vmatprep.mubr.f32.mxu0 0.0
    %161 = vmatmul.mubr.f32.gmra.mxu0 %v72
    %v162 = vpop.f32.mrf.mxu0
    %v163 = vadd.f32 %v94, %v162
    %v164 = vpop.f32.mrf.mxu0
    %165 = vmatprep.mubr.f32.mxu0 0.0
    %166 = vmatmul.mubr.f32.gmra.mxu0 %v73
    %v167 = vpop.f32.mrf.mxu0
    %v168 = vadd.f32 %v94, %v167
    %v169 = vpop.f32.mrf.mxu0
    %170 = vdwg.mxu0
    %v171 = vmul.f32 %v163, 0.5
    %v172 = vmul.f32 %v168, 0.5
    %v173 = vmul.f32 %v163, 0.70710677
    %v174 = vmul.f32 %v168, 0.70710677
    %v175 = verf.f32.pop %v173
    %v176 = verf.f32.pop %v174
    %v177 = vadd.f32 %v175, 1.0
    %v178 = vadd.f32 %v176, 1.0
    %v179 = vmul.f32 %v171, %v177
    %v180 = vmul.f32 %v172, %v178
    %v181 = vld [vmem:[#allocation7] sm:$0xff]
    %v182 = vld [vmem:[#allocation7 + $0x8] sm:$0xff]
    %v183 = vld [vmem:[#allocation7 + $0x10] sm:$0xff]
    %v184 = vld [vmem:[#allocation7 + $0x18] sm:$0xff]
    %v185 = vld [vmem:[#allocation7 + $0x20] sm:$0xff]
    %v186 = vld [vmem:[#allocation7 + $0x28] sm:$0xff]
    %v187 = vld [vmem:[#allocation7 + $0x30] sm:$0xff]
    %v188 = vld [vmem:[#allocation7 + $0x38] sm:$0xff]
    %v189 = vld [vmem:[#allocation7 + $0x40] sm:$0xff]
    %v190 = vld [vmem:[#allocation7 + $0x48] sm:$0xff]
    %v191 = vld [vmem:[#allocation7 + $0x50] sm:$0xff]
    %v192 = vld [vmem:[#allocation7 + $0x58] sm:$0xff]
    %v193 = vld [vmem:[#allocation7 + $0x60] sm:$0xff]
    %v194 = vld [vmem:[#allocation7 + $0x68] sm:$0xff]
    %v195 = vld [vmem:[#allocation7 + $0x70] sm:$0xff]
    %v196 = vld [vmem:[#allocation7 + $0x78] sm:$0xff]
    %v198 = vlaneseq
    %v199 = vshrl.u32 %v198, 7
    %v200 = vsub.s32 0, %v199
    %v201 = vrot.slane %v69, %v200
    %203 = vmatprep.subr.mxu0 0.0
    %204 = vmatpush1.msra.mxu0 %v196
    %205 = vmatprep.subr.mxu0 0.0
    %206 = vmatpush1.msra.mxu0 %v195
    %207 = vmatprep.subr.mxu0 0.0
    %208 = vmatpush1.msra.mxu0 %v194
    %209 = vmatprep.subr.mxu0 0.0
    %210 = vmatpush1.msra.mxu0 %v193
    %211 = vmatprep.subr.mxu0 0.0
    %212 = vmatpush1.msra.mxu0 %v192
    %213 = vmatprep.subr.mxu0 0.0
    %214 = vmatpush1.msra.mxu0 %v191
    %215 = vmatprep.subr.mxu0 0.0
    %216 = vmatpush1.msra.mxu0 %v190
    %217 = vmatprep.subr.mxu0 0.0
    %218 = vmatpush1.msra.mxu0 %v189
    %219 = vmatprep.subr.mxu0 0.0
    %220 = vmatpush1.msra.mxu0 %v188
    %221 = vmatprep.subr.mxu0 0.0
    %222 = vmatpush1.msra.mxu0 %v187
    %223 = vmatprep.subr.mxu0 0.0
    %224 = vmatpush1.msra.mxu0 %v186
    %225 = vmatprep.subr.mxu0 0.0
    %226 = vmatpush1.msra.mxu0 %v185
    %227 = vmatprep.subr.mxu0 0.0
    %228 = vmatpush1.msra.mxu0 %v184
    %229 = vmatprep.subr.mxu0 0.0
    %230 = vmatpush1.msra.mxu0 %v183
    %231 = vmatprep.subr.mxu0 0.0
    %232 = vmatpush1.msra.mxu0 %v182
    %233 = vmatprep.subr.mxu0 0.0
    %234 = vmatpush1.msra.mxu0 %v181
    %235 = vmatprep.subr.mxu0 0.0
    %236 = vmatpush2.msra.mxu0 0.0
    %237 = vmatprep.subr.mxu0 0.0
    %238 = vmatpush2.msra.mxu0 0.0
    %239 = vmatprep.subr.mxu0 0.0
    %240 = vmatpush2.msra.mxu0 0.0
    %241 = vmatprep.subr.mxu0 0.0
    %242 = vmatpush2.msra.mxu0 0.0
    %243 = vmatprep.subr.mxu0 0.0
    %244 = vmatpush2.msra.mxu0 0.0
    %245 = vmatprep.subr.mxu0 0.0
    %246 = vmatpush2.msra.mxu0 0.0
    %247 = vmatprep.subr.mxu0 0.0
    %248 = vmatpush2.msra.mxu0 0.0
    %249 = vmatprep.subr.mxu0 0.0
    %250 = vmatpush2.msra.mxu0 0.0
    %251 = vmatprep.subr.mxu0 0.0
    %252 = vmatpush2.msra.mxu0 0.0
    %253 = vmatprep.subr.mxu0 0.0
    %254 = vmatpush2.msra.mxu0 0.0
    %255 = vmatprep.subr.mxu0 0.0
    %256 = vmatpush2.msra.mxu0 0.0
    %257 = vmatprep.subr.mxu0 0.0
    %258 = vmatpush2.msra.mxu0 0.0
    %259 = vmatprep.subr.mxu0 0.0
    %260 = vmatpush2.msra.mxu0 0.0
    %261 = vmatprep.subr.mxu0 0.0
    %262 = vmatpush2.msra.mxu0 0.0
    %263 = vmatprep.subr.mxu0 0.0
    %264 = vmatpush2.msra.mxu0 0.0
    %265 = vmatprep.subr.mxu0 0.0
    %266 = vmatpush2.msra.mxu0 0.0
    %267 = vmatprep.mubr.f32.mxu0 0.0
    %268 = vmatmul.mubr.f32.gmra.mxu0 %v179
    %v269 = vpop.f32.mrf.mxu0
    %v270 = vadd.f32 %v201, %v269
    %v271 = vpop.f32.mrf.mxu0
    %272 = vmatprep.mubr.f32.mxu0 0.0
    %273 = vmatmul.mubr.f32.gmra.mxu0 %v180
    %v274 = vpop.f32.mrf.mxu0
    %v275 = vadd.f32 %v201, %v274
    %v276 = vpop.f32.mrf.mxu0
    %277 = vdwg.mxu0
    %v278 = vadd.f32 %v270, %v72
    %v279 = vadd.f32 %v275, %v73
    %280 = vadd.xlane.f32.xlu0 %v278
    %v281 = vpop.xlane.xlu0 %280
    %282 = vadd.xlane.f32.xlu0 %v279
    %v283 = vpop.xlane.xlu0 %282
    %v284 = vmul.f32 %v281, 0.03125
    %v285 = vmul.f32 %v283, 0.03125
    %v286 = vmul.f32 %v278, %v278
    %v287 = vmul.f32 %v279, %v279
    %288 = vadd.xlane.f32.xlu0 %v286
    %v289 = vpop.xlane.xlu0 %288
    %290 = vadd.xlane.f32.xlu0 %v287
    %v291 = vpop.xlane.xlu0 %290
    %v292 = vmul.f32 %v289, 0.03125
    %v293 = vmul.f32 %v291, 0.03125
    %v294 = vmul.f32 %v284, %v284
    %v295 = vmul.f32 %v285, %v285
    %v296 = vsub.f32 %v292, %v294
    %v297 = vsub.f32 %v293, %v295
    %v298 = vsub.f32 %v278, %v284
    %v299 = vsub.f32 %v279, %v285
    %v300 = vadd.f32 %v296, 1e-05
    %v301 = vadd.f32 %v297, 1e-05
    %v302 = vrsqrt.pop %v300
    %v303 = vrsqrt.pop %v301
    %v304 = vmul.f32 %v298, %v302
    %v305 = vmul.f32 %v299, %v303
    %v307 = vlaneseq
    %v308 = vshrl.u32 %v307, 7
    %v309 = vsub.s32 0, %v308
    %v310 = vrot.slane %v70, %v309
    %v312 = vmul.f32 %v304, %v310
    %v313 = vmul.f32 %v305, %v310
    %v315 = vlaneseq
    %v316 = vshrl.u32 %v315, 7
    %v317 = vsub.s32 0, %v316
    %v318 = vrot.slane %v71, %v317
    %v320 = vadd.f32 %v312, %v318
    %v321 = vadd.f32 %v313, %v318
    %322 = vst [vmem:[#allocation8] sm:$0xff] %v320
    %323 = vst [vmem:[#allocation8 + $0x8] sm:$0xff] %v321
    // Predicated region
    $region42: #{tpu_custom_call.1} parent=1 // pred_check
      _
    $region43: #{tpu_custom_call.1} parent=1 // pred_check_branch
      %325 = sbr.rel (0) target = $region45
    $region44: #{tpu_custom_call.1} parent=1 // pred_region
      %s327 = ssub.s32 256, 256
      %328 = vsyncadd [#allocation4], %s327
      %s329 = sshll.u32 [#allocation8], 4
      %s330 = int_to_ptr.vmem [resolvable:$true] %s329
      %335 = dma.vmem_to_hbm [thread:$0]  %s330, 256, %s7, [#allocation4], 128, 128, 8
    $region45: #{tpu_custom_call.1} parent=1 // pred_fallthru
      _
    // Predicated region
    $region46: #{tpu_custom_call.1} parent=1 // pred_check
      _
    $region47: #{tpu_custom_call.1} parent=1 // pred_check_branch
      %337 = sbr.rel (0) target = $region49
    $region48: #{tpu_custom_call.1} parent=1 // pred_region
      %338 = dma.done [#allocation4], 256
    $region49: #{tpu_custom_call.1} parent=1 // pred_fallthru
      _
    %339 = vsyncpa [#allocation3], 1
    %340 = vsyncpa [#allocation6], 1
    %341 = vsyncpa [#allocation4], 1

</llo_original>
